<compile_context>
chip_gen: v5e
topology: v5e:2x2
jax: 0.10.0
libtpu: 0.0.40
codegen_flags: <defaults>
</compile_context>

<pallas_src>
import functools

import jax
import jax.numpy as jnp
from jax.experimental import pallas as pl
from jax.experimental.pallas import tpu as pltpu


def _round_up(x, m):
    return (x + m - 1) // m * m


def _actor_kernel(x_ref, w1_ref, b1_ref, w2_ref, b2_ref, o_ref, *, use_softmax):
    # x:  (TB, obs_dim) f32      w1: (obs_dim, H) bf16   b1: (1, H) f32
    # w2: (H, A)        bf16     b2: (1, A)       f32    o:  (TB, A) f32
    x = x_ref[...]

    # hidden = relu(x @ W1 + b1): bf16 MXU operands, f32 accumulation,
    # elementwise math stays f32 (v5e VPU/EUP have no bf16).
    h = jnp.dot(x.astype(jnp.bfloat16), w1_ref[...],
                preferred_element_type=jnp.float32)
    h = jnp.maximum(h + b1_ref[...], 0.0)

    # logits = h @ W2 + b2
    logits = jnp.dot(h.astype(jnp.bfloat16), w2_ref[...],
                     preferred_element_type=jnp.float32) + b2_ref[...]

    if use_softmax:
        # numerically-stable softmax over the action dim
        m = jnp.max(logits, axis=-1, keepdims=True)
        e = jnp.exp(logits - m)
        denom = jnp.sum(e, axis=-1, keepdims=True)
        out = e * pl.reciprocal(denom, approx=True)   # EUP vrcp, ~free
    else:
        out = logits

    o_ref[...] = out.astype(o_ref.dtype)


def prepare_params(params):
    """One-time weight prep (bf16 MXU operands, f32 biases). Call once, reuse."""
    return {
        "w1": params["w1"].astype(jnp.bfloat16),
        "b1": params["b1"].astype(jnp.float32),
        "w2": params["w2"].astype(jnp.bfloat16),
        "b2": params["b2"].astype(jnp.float32),
    }


def actor_forward(obs, prepared_params, state=None, use_softmax=True,
                  block_batch=8192):
    """Pallas-backed equivalent of Actor.forward(obs, state, info).

    obs:             (B, obs_dim) float32
    prepared_params: output of prepare_params() — w1 (obs_dim,H) bf16,
                     b1 (1,H) f32, w2 (H,A) bf16, b2 (1,A) f32
    Returns (probs_or_logits, state) like the PyTorch module.
    """
    w1, b1, w2, b2 = (prepared_params["w1"], prepared_params["b1"],
                      prepared_params["w2"], prepared_params["b2"])
    B, obs_dim = obs.shape
    H = w1.shape[1]
    A = w2.shape[1]

    # Batch tile: big enough to amortize per-step overhead, capped so the
    # "parallel" grid has >= 2 steps for large B (v7x: 2 TCs).
    TB = max(8, min(block_batch, _round_up(pl.cdiv(B, 2), 8)))
    grid = (pl.cdiv(B, TB),)     # partial last block handled by Pallas

    kernel = functools.partial(_actor_kernel, use_softmax=use_softmax)

    flops = 2 * B * (obs_dim * H + H * A)
    bytes_accessed = (4 * B * (obs_dim + A)        # f32 stream in / out
                      + 2 * (obs_dim * H + H * A)  # bf16 weights (resident)
                      + 4 * (H + A))               # f32 biases
    cost = pl.CostEstimate(
        flops=flops,
        transcendentals=(B * A) if use_softmax else 0,
        bytes_accessed=bytes_accessed,
    )

    out = pl.pallas_call(
        kernel,
        out_shape=jax.ShapeDtypeStruct((B, A), jnp.float32),
        grid=grid,
        in_specs=[
            pl.BlockSpec((TB, obs_dim), lambda i: (i, 0)),   # streamed tiles
            pl.BlockSpec(w1.shape, lambda i: (0, 0)),        # VMEM-resident
            pl.BlockSpec(b1.shape, lambda i: (0, 0)),
            pl.BlockSpec(w2.shape, lambda i: (0, 0)),
            pl.BlockSpec(b2.shape, lambda i: (0, 0)),
        ],
        out_specs=pl.BlockSpec((TB, A), lambda i: (i, 0)),
        compiler_params=pltpu.CompilerParams(
            dimension_semantics=("parallel",),   # v7x: batch across 2 TCs
            vmem_limit_bytes=32 << 20,
        ),
        cost_estimate=cost,
    )(obs, w1, b1, w2, b2)

    return out, state


def init_params(key, obs_dim, hidden_dim, act_dim):
    k1, k2, k3, k4 = jax.random.split(key, 4)
    scale1 = 1.0 / jnp.sqrt(jnp.float32(obs_dim))
    scale2 = 1.0 / jnp.sqrt(jnp.float32(hidden_dim))
    return {
        "w1": jax.random.uniform(k1, (obs_dim, hidden_dim), jnp.float32, -scale1, scale1),
        "b1": jax.random.uniform(k2, (1, hidden_dim), jnp.float32, -scale1, scale1),
        "w2": jax.random.uniform(k3, (hidden_dim, act_dim), jnp.float32, -scale2, scale2),
        "b2": jax.random.uniform(k4, (1, act_dim), jnp.float32, -scale2, scale2),
    }


def _reference_forward(obs, params, use_softmax=True):
    # Mirrors the kernel's bf16-operand / f32-accumulate math.
    x = obs.astype(jnp.bfloat16)
    w1 = params["w1"].astype(jnp.bfloat16)
    w2 = params["w2"].astype(jnp.bfloat16)
    h = jnp.maximum(
        jnp.dot(x, w1, preferred_element_type=jnp.float32) + params["b1"], 0.0)
    logits = jnp.dot(h.astype(jnp.bfloat16), w2,
                     preferred_element_type=jnp.float32) + params["b2"]
    if use_softmax:
        return jax.nn.softmax(logits, axis=-1)
    return logits


if __name__ == "__main__":
    key = jax.random.PRNGKey(0)
    k_obs, k_params = jax.random.split(key)

    batch, obs_dim, hidden_dim, act_dim = 2, 16, 32, 8

    obs = jax.random.normal(k_obs, (batch, obs_dim), dtype=jnp.float32)
    params = init_params(k_params, obs_dim, hidden_dim, act_dim)
    prepared = prepare_params(params)   # one-time weight prep (bf16 cast)

    # softmax path (Actor(use_softmax=True))
    out, state = actor_forward(obs, prepared, state=None, use_softmax=True)
    out = jax.block_until_ready(out)
    ref = _reference_forward(obs, params, use_softmax=True)
    assert out.shape == (batch, act_dim)
    assert jnp.allclose(out, ref, atol=2e-3, rtol=2e-3), "softmax mismatch vs reference"
    # approx reciprocal => rows sum to 1 only to ~1e-3 (flagged for samplers)
    assert jnp.allclose(jnp.sum(out, axis=-1), 1.0, atol=2e-3)

    # raw-logits path (Actor(use_softmax=False))
    logits, _ = actor_forward(obs, prepared, state=None, use_softmax=False)
    logits = jax.block_until_ready(logits)
    ref_logits = _reference_forward(obs, params, use_softmax=False)
    assert jnp.allclose(logits, ref_logits, atol=2e-2, rtol=2e-2), "logits mismatch vs reference"

    print("KERNEL_OK")
</pallas_src>

<mosaic_0001>
module attributes {stable_mosaic.version = 11 : i64} {
  func.func @_actor_kernel(%arg0: i32, %arg1: memref<8x16xf32, #tpu.memory_space<vmem>>, %arg2: memref<16x32xbf16, #tpu.memory_space<vmem>>, %arg3: memref<1x32xf32, #tpu.memory_space<vmem>>, %arg4: memref<32x8xbf16, #tpu.memory_space<vmem>>, %arg5: memref<1x8xf32, #tpu.memory_space<vmem>>, %arg6: memref<8x8xf32, #tpu.memory_space<vmem>>) attributes {dimension_semantics = [#tpu.dimension_semantics<parallel>], iteration_bounds = array<i64: 1>, scalar_prefetch = 0 : i64, scratch_operands = 0 : i64, tpu.core_type = #tpu.core_type<tc>, window_params = [{transform_indices = @transform_0, window_bounds = array<i64: 8, 16>}, {pipeline_mode = #tpu.pipeline_mode<synchronous>, transform_indices = @transform_1, window_bounds = array<i64: 16, 32>}, {pipeline_mode = #tpu.pipeline_mode<synchronous>, transform_indices = @transform_2, window_bounds = array<i64: 1, 32>}, {pipeline_mode = #tpu.pipeline_mode<synchronous>, transform_indices = @transform_3, window_bounds = array<i64: 32, 8>}, {pipeline_mode = #tpu.pipeline_mode<synchronous>, transform_indices = @transform_4, window_bounds = array<i64: 1, 8>}, {transform_indices = @transform_5, window_bounds = array<i64: 8, 8>}]} {
    %c0 = arith.constant 0 : index
    %c0_0 = arith.constant 0 : index
    %0 = vector.load %arg1[%c0, %c0_0] : memref<8x16xf32, #tpu.memory_space<vmem>>, vector<8x16xf32>
    %1 = arith.truncf %0 : vector<8x16xf32> to vector<8x16xbf16>
    %c0_1 = arith.constant 0 : index
    %c0_2 = arith.constant 0 : index
    %2 = vector.load %arg2[%c0_1, %c0_2] : memref<16x32xbf16, #tpu.memory_space<vmem>>, vector<16x32xbf16>
    %cst = arith.constant dense<0.000000e+00> : vector<8x32xf32>
    %3 = tpu.matmul %1, %2, %cst {dimension_numbers = #tpu.dot_dimension_numbers<[1], [0], [0], [1], [0, 0, 1, 1], [], []>} : vector<8x16xbf16>, vector<16x32xbf16>, vector<8x32xf32> -> vector<8x32xf32>
    %c0_3 = arith.constant 0 : index
    %c0_4 = arith.constant 0 : index
    %4 = vector.load %arg3[%c0_3, %c0_4] : memref<1x32xf32, #tpu.memory_space<vmem>>, vector<1x32xf32>
    %5 = vector.broadcast %4 : vector<1x32xf32> to vector<8x32xf32>
    %6 = arith.addf %3, %5 : vector<8x32xf32>
    %cst_5 = arith.constant 0.000000e+00 : f32
    %7 = vector.broadcast %cst_5 : f32 to vector<8x32xf32>
    %8 = arith.maximumf %6, %7 : vector<8x32xf32>
    %9 = arith.truncf %8 : vector<8x32xf32> to vector<8x32xbf16>
    %c0_6 = arith.constant 0 : index
    %c0_7 = arith.constant 0 : index
    %10 = vector.load %arg4[%c0_6, %c0_7] : memref<32x8xbf16, #tpu.memory_space<vmem>>, vector<32x8xbf16>
    %cst_8 = arith.constant dense<0.000000e+00> : vector<8x8xf32>
    %11 = tpu.matmul %9, %10, %cst_8 {dimension_numbers = #tpu.dot_dimension_numbers<[1], [0], [0], [1], [0, 0, 1, 1], [], []>} : vector<8x32xbf16>, vector<32x8xbf16>, vector<8x8xf32> -> vector<8x8xf32>
    %c0_9 = arith.constant 0 : index
    %c0_10 = arith.constant 0 : index
    %12 = vector.load %arg5[%c0_9, %c0_10] : memref<1x8xf32, #tpu.memory_space<vmem>>, vector<1x8xf32>
    %13 = vector.broadcast %12 : vector<1x8xf32> to vector<8x8xf32>
    %14 = arith.addf %11, %13 : vector<8x8xf32>
    %cst_11 = arith.constant dense<0xFF800000> : vector<8xf32>
    %15 = vector.multi_reduction <maximumf>, %14, %cst_11 [1] : vector<8x8xf32> to vector<8xf32>
    %16 = vector.shape_cast %15 : vector<8xf32> to vector<8x1xf32>
    %17 = vector.broadcast %16 : vector<8x1xf32> to vector<8x8xf32>
    %18 = arith.subf %14, %17 : vector<8x8xf32>
    %19 = math.exp %18 : vector<8x8xf32>
    %cst_12 = arith.constant dense<0.000000e+00> : vector<8xf32>
    %20 = vector.multi_reduction <add>, %19, %cst_12 [1] : vector<8x8xf32> to vector<8xf32>
    %21 = vector.shape_cast %20 : vector<8xf32> to vector<8x1xf32>
    %22 = tpu.reciprocal %21 {approx = true} : vector<8x1xf32> -> vector<8x1xf32>
    %23 = vector.broadcast %22 : vector<8x1xf32> to vector<8x8xf32>
    %24 = arith.mulf %19, %23 : vector<8x8xf32>
    %c0_13 = arith.constant 0 : index
    %c0_14 = arith.constant 0 : index
    %25 = vector.load %arg6[%c0_13, %c0_14] : memref<8x8xf32, #tpu.memory_space<vmem>>, vector<8x8xf32>
    tpu.vector_store %arg6[%c0_13, %c0_14], %24 {strides = array<i32>} : memref<8x8xf32, #tpu.memory_space<vmem>>, vector<8x8xf32>,
    return
  }
  func.func @transform_0(%arg0: i32) -> (i32, i32) {
    %c0_i32 = arith.constant 0 : i32
    %c0_i32_0 = arith.constant 0 : i32
    return %arg0, %c0_i32 : i32, i32
  }
  func.func @transform_1(%arg0: i32) -> (i32, i32) {
    %c0_i32 = arith.constant 0 : i32
    %c0_i32_0 = arith.constant 0 : i32
    %c0_i32_1 = arith.constant 0 : i32
    return %c0_i32, %c0_i32_0 : i32, i32
  }
  func.func @transform_2(%arg0: i32) -> (i32, i32) {
    %c0_i32 = arith.constant 0 : i32
    %c0_i32_0 = arith.constant 0 : i32
    %c0_i32_1 = arith.constant 0 : i32
    return %c0_i32, %c0_i32_0 : i32, i32
  }
  func.func @transform_3(%arg0: i32) -> (i32, i32) {
    %c0_i32 = arith.constant 0 : i32
    %c0_i32_0 = arith.constant 0 : i32
    %c0_i32_1 = arith.constant 0 : i32
    return %c0_i32, %c0_i32_0 : i32, i32
  }
  func.func @transform_4(%arg0: i32) -> (i32, i32) {
    %c0_i32 = arith.constant 0 : i32
    %c0_i32_0 = arith.constant 0 : i32
    %c0_i32_1 = arith.constant 0 : i32
    return %c0_i32, %c0_i32_0 : i32, i32
  }
  func.func @transform_5(%arg0: i32) -> (i32, i32) {
    %c0_i32 = arith.constant 0 : i32
    %c0_i32_0 = arith.constant 0 : i32
    return %arg0, %c0_i32 : i32, i32
  }
}

</mosaic_0001>

<llo_original>
// kernel: tpu_custom_call.1
$region0: #{tpu_custom_call.1}
  #allocation0 [shape = 'u32[]', space=smem, size = 0x4, offset = 0x4, fixed_abs, tag = 'smem constant byte address 0x4 - core index']
  #allocation1 [shape = 'u32[72,128]{1,0:T(1,128)}', space=vmem, size = 0x9000, scoped, tag = 'internal scratch']
  %s0 = inlined_call_operand.vmem [shape: f32[2,16], index: 0, kind: input, shape index: {}]
  %s1 = inlined_call_operand.vmem [shape: bf16[16,32], index: 1, kind: input, shape index: {}]
  %s2 = inlined_call_operand.vmem [shape: f32[1,32], index: 2, kind: input, shape index: {}]
  %s3 = inlined_call_operand.vmem [shape: bf16[32,8], index: 3, kind: input, shape index: {}]
  %s4 = inlined_call_operand.vmem [shape: f32[1,8], index: 4, kind: input, shape index: {}]
  %s5 = inlined_call_operand.hbm [shape: f32[2,8], index: 5, kind: output, shape index: {}]
  %s6 = sld [smem:[#allocation0]]
  $region30: #{tpu_custom_call.1} parent=0
    _
  %s8 = ssub.s32 1, %s6
  %s9 = scalar_select 0, %s8, %s6
  $region1: #{tpu_custom_call.1} parent=0
    #allocation2 [shape = 'u8[4096]{0}', space=vmem, size = 0x1000, scoped, tag = 'output window, operand 0, single buffered']
    #allocation3 [shape = 's32[1]{0}', space=sflag, size = 0x4, scoped, tag = 'scoped memory for tpu_custom_call.1']
    %10 = vsyncpa [#allocation3], 0
    // Predicated region
    $region2: #{tpu_custom_call.1} parent=1 // pred_check
      _
    $region3: #{tpu_custom_call.1} parent=1 // pred_check_branch
      %12 = sbr.rel (0) target = $region5
    $region4: #{tpu_custom_call.1} parent=1 // pred_region
      _
    $region5: #{tpu_custom_call.1} parent=1 // pred_fallthru
      _
    // Predicated region
    $region6: #{tpu_custom_call.1} parent=1 // pred_check
      _
    $region7: #{tpu_custom_call.1} parent=1 // pred_check_branch
      %14 = sbr.rel (0) target = $region9
    $region8: #{tpu_custom_call.1} parent=1 // pred_region
      _
    $region9: #{tpu_custom_call.1} parent=1 // pred_fallthru
      _
    // Predicated region
    $region10: #{tpu_custom_call.1} parent=1 // pred_check
      _
    $region11: #{tpu_custom_call.1} parent=1 // pred_check_branch
      %16 = sbr.rel (0) target = $region13
    $region12: #{tpu_custom_call.1} parent=1 // pred_region
      _
    $region13: #{tpu_custom_call.1} parent=1 // pred_fallthru
      _
    // Predicated region
    $region14: #{tpu_custom_call.1} parent=1 // pred_check
      _
    $region15: #{tpu_custom_call.1} parent=1 // pred_check_branch
      %18 = sbr.rel (0) target = $region17
    $region16: #{tpu_custom_call.1} parent=1 // pred_region
      _
    $region17: #{tpu_custom_call.1} parent=1 // pred_fallthru
      _
    // Predicated region
    $region18: #{tpu_custom_call.1} parent=1 // pred_check
      _
    $region19: #{tpu_custom_call.1} parent=1 // pred_check_branch
      %20 = sbr.rel (0) target = $region21
    $region20: #{tpu_custom_call.1} parent=1 // pred_region
      _
    $region21: #{tpu_custom_call.1} parent=1 // pred_fallthru
      _
    %v22 = vld [vmem:[%s0] sm:$0xff]
    %v23 = vpack.c.bf16 %v22, %v22
    %v24 = vld [vmem:[%s1] sm:$0xf]
    %v25 = vld [vmem:[%s1 + $0x4] sm:$0xf]
    %v26 = vld [vmem:[%s2] sm:$0x1]
    %v28 = vperm.slane %v26, 0
    %v32 = vunpack.c.l.b16 %v24
    %v33 = vunpack.c.l.b16 %v25
    %v34 = vpack.c.b16 %v33, %v32
    %vm36 = vcmask 130048
    %v38 = vsel %vm36, %v23, 0
    %40 = vmatpush.bf16.msra.mxu0 0
    %41 = vmatpush.bf16.msra.mxu0 0
    %42 = vmatpush.bf16.msra.mxu0 0
    %43 = vmatpush.bf16.msra.mxu0 0
    %44 = vmatpush.bf16.msra.mxu0 0
    %45 = vmatpush.bf16.msra.mxu0 0
    %46 = vmatpush.bf16.msra.mxu0 0
    %47 = vmatpush.bf16.msra.mxu0 %v34
    %48 = vmatmul.bf16.gmra.mxu0 %v38
    %v49 = vpop.f32.mrf.mxu0
    %v50 = vadd.f32 %v28, %v49
    %v51 = vpop.f32.mrf.mxu0
    %52 = vdwg.mxu0
    %v53 = vmax.f32 %v50, 0.0
    %v54 = vpack.c.bf16 %v53, %v53
    %v55 = vld [vmem:[%s3] sm:$0xf]
    %v56 = vld [vmem:[%s3 + $0x4] sm:$0xf]
    %v57 = vld [vmem:[%s3 + $0x8] sm:$0xf]
    %v58 = vld [vmem:[%s3 + $0xc] sm:$0xf]
    %v59 = vld [vmem:[%s4] sm:$0x1]
    %v61 = vperm.slane %v59, 0
    %v67 = vunpack.c.l.b16 %v55
    %v68 = vunpack.c.l.b16 %v56
    %v69 = vunpack.c.l.b16 %v57
    %v70 = vunpack.c.l.b16 %v58
    %v71 = vpack.c.b16 %v68, %v67
    %v72 = vpack.c.b16 %v70, %v69
    %vm75 = vcmask 261120
    %v77 = vsel %vm75, %v54, 0
    %79 = vmatpush.bf16.msra.mxu0 0
    %80 = vmatpush.bf16.msra.mxu0 0
    %81 = vmatpush.bf16.msra.mxu0 0
    %82 = vmatpush.bf16.msra.mxu0 0
    %83 = vmatpush.bf16.msra.mxu0 0
    %84 = vmatpush.bf16.msra.mxu0 0
    %85 = vmatpush.bf16.msra.mxu0 %v72
    %86 = vmatpush.bf16.msra.mxu0 %v71
    %87 = vmatmul.bf16.gmra.mxu0 %v77
    %v88 = vpop.f32.mrf.mxu0
    %v89 = vadd.f32 %v61, %v88
    %v90 = vpop.f32.mrf.mxu0
    %91 = vdwg.mxu0
    %vm92 = vcmask 64512
    %v93 = vsel %vm92, %v89, -inf
    %94 = vmax.xlane.f32.xlu0 %v93
    %v95 = vpop.xlane.xlu0 %94
    %v96 = vsub.f32 %v89, %v95
    %v97 = vmul.f32 %v96, 1.442695
    %v98 = vpow.pop %v97
    %v99 = vsel %vm92, %v98, 0.0
    %100 = vadd.xlane.f32.xlu0 %v99
    %v101 = vpop.xlane.xlu0 %100
    %v102 = vrcp.pop %v101
    %v103 = vmul.f32 %v98, %v102
    %104 = vst.msk [vmem:[#allocation2] sm:$0xff] %vm92, %v103
    // Predicated region
    $region22: #{tpu_custom_call.1} parent=1 // pred_check
      _
    $region23: #{tpu_custom_call.1} parent=1 // pred_check_branch
      %106 = sbr.rel (0) target = $region25
    $region24: #{tpu_custom_call.1} parent=1 // pred_region
      %108 = vsyncadd [#allocation3], 96
      %s109 = sshll.u32 [#allocation2], 4
      %s110 = int_to_ptr.vmem [resolvable:$true] %s109
      %s111 = sshll.u32 %s5, 4
      %s112 = int_to_ptr.hbm [resolvable:$true] %s111
      %117 = dma.vmem_to_hbm [thread:$0]  %s110, 32, %s112, [#allocation3], 32, 32, 2
    $region25: #{tpu_custom_call.1} parent=1 // pred_fallthru
      _
    // Predicated region
    $region26: #{tpu_custom_call.1} parent=1 // pred_check
      _
    $region27: #{tpu_custom_call.1} parent=1 // pred_check_branch
      %119 = sbr.rel (0) target = $region29
    $region28: #{tpu_custom_call.1} parent=1 // pred_region
      %121 = dma.done [#allocation3], 128
    $region29: #{tpu_custom_call.1} parent=1 // pred_fallthru
      _
    %122 = vsyncpa [#allocation3], 1

</llo_original>
